<compile_context>
chip_gen: v7x
topology: tpu7x:2x2x1
jax: 0.10.0
libtpu: 0.0.40
codegen_flags: <defaults>
</compile_context>

<pallas_src>
import functools

import jax
import jax.numpy as jnp
from jax.experimental import pallas as pl
from jax.experimental.pallas import tpu as pltpu

LANE = 128


def _round_up(v: int, m: int) -> int:
    return -(-v // m) * m


def _make_kernel(inv_s: float, s_tile: int):
    n_chunks = s_tile // LANE

    def kernel(x_ref, w_ref, b_ref, o_ref, acc_ref):
        # x_ref:  (B_TILE, C, S_TILE)   streamed, double-buffered
        # w_ref:  (C, n_classes)        grid-invariant (DMA'd once)
        # b_ref:  (1, n_classes)        grid-invariant
        # o_ref:  (B_TILE, n_classes)   resident across the spatial axis
        # acc_ref:(B_TILE, C) f32       partial pooled-sum accumulator
        s_idx = pl.program_id(1)

        @pl.when(s_idx == 0)
        def _init():
            acc_ref[...] = jnp.zeros_like(acc_ref)

        # Fold the spatial tile 128 lanes at a time: each chunk is reduced
        # cross-lane on the XLU with f32 accumulation; only a chunk-sized
        # temporary is ever live (no full f32 copy of the tile).
        partial = jnp.sum(x_ref[:, :, 0:LANE], axis=-1, dtype=jnp.float32)
        for i in range(1, n_chunks):
            partial = partial + jnp.sum(
                x_ref[:, :, i * LANE:(i + 1) * LANE], axis=-1, dtype=jnp.float32)
        acc_ref[...] += partial

        @pl.when(s_idx == pl.num_programs(1) - 1)
        def _finalize():
            # Global average pool: scale the accumulated sum once by 1/(H*W).
            pooled = acc_ref[...] * inv_s                       # (B_TILE, C) f32

            # Matmul in the weight's stored dtype (bf16 MXU path if weights
            # are bf16); accumulate in f32.
            logits = jnp.dot(pooled.astype(w_ref.dtype), w_ref[...],
                             preferred_element_type=jnp.float32)
            logits = logits + b_ref[...].astype(jnp.float32)    # (B_TILE, n_classes)

            # Numerically stable softmax with an EXACT divide (runs once per
            # batch tile, so it is effectively free and keeps rows summing to 1).
            m = jnp.max(logits, axis=1, keepdims=True)
            e = jnp.exp(logits - m)
            denom = jnp.sum(e, axis=1, keepdims=True)
            probs = e / denom

            o_ref[...] = probs.astype(o_ref.dtype)

    return kernel


def _vmem_budget():
    """(tile-picker budget bytes, vmem_limit_bytes) — generation aware."""
    try:
        cap = int(pltpu.get_tpu_info().vmem_capacity_bytes)
    except Exception:
        cap = 64 * 1024 * 1024          # conservative fallback (v7x per-TC)
    budget = min(cap // 2, 64 * 1024 * 1024)
    vmem_limit = min(cap, budget + (8 << 20))   # small headroom for internals
    return budget, vmem_limit


def _est_vmem(b_tile, s_tile, C, n_classes, x_item, w_item):
    """Estimate of all resident VMEM for a given tiling (with layout padding)."""
    c_sub = _round_up(C, 8)
    nc_lane = _round_up(n_classes, LANE)
    x_stream = 2 * b_tile * c_sub * s_tile * x_item        # double-buffered x tiles
    chunk_tmp = 2 * b_tile * c_sub * LANE * 4              # in-flight f32 chunk reduce
    acc = _round_up(b_tile, 8) * _round_up(C, LANE) * 4    # (b_tile, C) f32 scratch
    w = 2 * c_sub * nc_lane * w_item                       # weight (budget 2 buffers)
    bias = 2 * 8 * nc_lane * w_item
    out = 2 * _round_up(b_tile, 8) * nc_lane * x_item
    return x_stream + chunk_tmp + acc + w + bias + out


def _pick_tiles(B, C, S_pad, n_classes, x_item, w_item, budget):
    # Batch-tile candidates: divisors of B that are a multiple of 8 (sublane
    # friendly) or equal to B; capped at B//2 for B>=16 so the "parallel"
    # batch axis spans both TensorCores on dual-TC chips (v7x).
    cap = B // 2 if B >= 16 else B
    b_cands = [d for d in range(min(B, cap, 128), 0, -1)
               if B % d == 0 and (d % 8 == 0 or d == B)]
    if not b_cands:
        b_cands = [B]
    # Spatial-tile candidates: lane-dense divisors of S_pad, descending.
    s_cands = [s for s in range(S_pad, 0, -LANE) if S_pad % s == 0]

    best = None
    for b_t in b_cands:
        for s_t in s_cands:
            if _est_vmem(b_t, s_t, C, n_classes, x_item, w_item) <= budget:
                # Prefer longer contiguous DMA runs (s_tile, up to 2 KiB-ish),
                # then the biggest streamed tile overall.
                key = (min(s_t, 2048), b_t * s_t, b_t)
                if best is None or key > best[0]:
                    best = (key, (b_t, s_t))
    if best is not None:
        return best[1]
    return min(b_cands), min(s_cands)   # smallest-tile fallback


@functools.partial(jax.jit, static_argnames=("spatial_tile", "batch_tile"))
def parnet_decoder(x, weight, bias, *, spatial_tile=None, batch_tile=None):
    """x: (B, C, H, W) NCHW; weight: (n_classes, C); bias: (n_classes,)."""
    B, C, H, W = x.shape
    n_classes = weight.shape[0]
    S = H * W
    inv_s = 1.0 / float(S)

    x_flat = x.reshape(B, C, S)                      # layout plumbing only
    S_pad = _round_up(S, LANE)
    if S_pad != S:
        # Zero padding is exact: finalize scales by 1/(H*W), not 1/S_pad.
        x_flat = jnp.pad(x_flat, ((0, 0), (0, 0), (0, S_pad - S)))

    w_t = weight.T                                   # (C, n_classes)
    b2 = bias.reshape(1, n_classes)

    budget, vmem_limit = _vmem_budget()
    b_tile, s_tile = _pick_tiles(B, C, S_pad, n_classes,
                                 x.dtype.itemsize, weight.dtype.itemsize, budget)
    if batch_tile is not None:
        b_tile = int(batch_tile)
    if spatial_tile is not None:
        s_tile = int(spatial_tile)
    assert B % b_tile == 0 and S_pad % s_tile == 0 and s_tile % LANE == 0

    grid = (B // b_tile, S_pad // s_tile)
    kernel = _make_kernel(inv_s, s_tile)

    return pl.pallas_call(
        kernel,
        out_shape=jax.ShapeDtypeStruct((B, n_classes), x.dtype),
        grid=grid,
        in_specs=[
            # Streamed, double-buffered x tiles.
            pl.BlockSpec((b_tile, C, s_tile), lambda b, s: (b, 0, s)),
            # Grid-invariant weight/bias: DMA'd once, resident in VMEM.
            pl.BlockSpec((C, n_classes), lambda b, s: (0, 0)),
            pl.BlockSpec((1, n_classes), lambda b, s: (0, 0)),
        ],
        # Same output block across the spatial (reduction) axis -> resident;
        # written only on the final spatial step of each batch tile.
        out_specs=pl.BlockSpec((b_tile, n_classes), lambda b, s: (b, 0)),
        scratch_shapes=[pltpu.VMEM((b_tile, C), jnp.float32)],
        compiler_params=pltpu.CompilerParams(
            dimension_semantics=("parallel", "arbitrary"),
            vmem_limit_bytes=vmem_limit),
    )(x_flat, w_t, b2)


def parnet_decoder_ref(x, weight, bias):
    """Pure-JAX reference for correctness check."""
    pooled = jnp.mean(x, axis=(2, 3))
    logits = pooled @ weight.T + bias
    return jax.nn.softmax(logits, axis=1)


if __name__ == "__main__":
    key = jax.random.PRNGKey(0)
    kx, kw, kb, kx2 = jax.random.split(key, 4)

    # Small shapes consistent with the module: B=2, in_channels=4, 16x16
    # spatial, n_classes=8.
    B, C, H, W = 2, 4, 16, 16
    n_classes = 8

    x = jax.random.normal(kx, (B, C, H, W), dtype=jnp.float32)
    # nn.Linear-style uniform init with bound 1/sqrt(C).
    bound = 1.0 / jnp.sqrt(jnp.float32(C))
    weight = jax.random.uniform(kw, (n_classes, C), jnp.float32, -bound, bound)
    bias = jax.random.uniform(kb, (n_classes,), jnp.float32, -bound, bound)

    ref = parnet_decoder_ref(x, weight, bias)

    REF_TOL = 1e-4     # kernel vs pure-JAX reference
    SUM_TOL = 1e-5     # rows of an exact-divide softmax sum to 1 tightly

    # 1) Auto-picked tile (here S_TILE == 256: single spatial step, chunk fold).
    out_auto = jax.block_until_ready(parnet_decoder(x, weight, bias))
    assert out_auto.shape == (B, n_classes)
    assert jnp.allclose(out_auto, ref, atol=REF_TOL, rtol=REF_TOL), "auto-tile mismatch vs reference"
    assert jnp.allclose(jnp.sum(out_auto, axis=1), 1.0, atol=SUM_TOL), "rows must sum to 1"

    # 2) Forced 128-lane spatial tile: exercises the multi-step accumulation
    #    (grid (1, 2)) and the pl.when init/finalize phases.
    out_tiled = jax.block_until_ready(parnet_decoder(x, weight, bias, spatial_tile=128))
    assert out_tiled.shape == (B, n_classes)
    assert jnp.allclose(out_tiled, ref, atol=REF_TOL, rtol=REF_TOL), "tiled mismatch vs reference"
    assert jnp.allclose(jnp.sum(out_tiled, axis=1), 1.0, atol=SUM_TOL), "rows must sum to 1"

    # 3) Non-lane-aligned spatial (7x7 -> padded to 128): exercises the exact
    #    zero-padding path used for ParNet-style 7x7 / 14x14 feature maps.
    x2 = jax.random.normal(kx2, (B, C, 7, 7), dtype=jnp.float32)
    ref2 = parnet_decoder_ref(x2, weight, bias)
    out_pad = jax.block_until_ready(parnet_decoder(x2, weight, bias))
    assert out_pad.shape == (B, n_classes)
    assert jnp.allclose(out_pad, ref2, atol=REF_TOL, rtol=REF_TOL), "padded-S mismatch vs reference"
    assert jnp.allclose(jnp.sum(out_pad, axis=1), 1.0, atol=SUM_TOL), "rows must sum to 1"

    print("KERNEL_OK")
</pallas_src>

<mosaic_0001>
module attributes {stable_mosaic.version = 11 : i64} {
  func.func @kernel(%arg0: i32, %arg1: i32, %arg2: memref<2x4x256xf32, #tpu.memory_space<vmem>>, %arg3: memref<4x8xf32, #tpu.memory_space<vmem>>, %arg4: memref<1x8xf32, #tpu.memory_space<vmem>>, %arg5: memref<2x8xf32, #tpu.memory_space<vmem>>, %arg6: memref<2x4xf32, #tpu.memory_space<vmem>>) attributes {dimension_semantics = [#tpu.dimension_semantics<parallel>, #tpu.dimension_semantics<arbitrary>], iteration_bounds = array<i64: 1, 1>, scalar_prefetch = 0 : i64, scratch_operands = 1 : i64, tpu.core_type = #tpu.core_type<tc>, window_params = [{transform_indices = @transform_0, window_bounds = array<i64: 2, 4, 256>}, {pipeline_mode = #tpu.pipeline_mode<synchronous>, transform_indices = @transform_1, window_bounds = array<i64: 4, 8>}, {pipeline_mode = #tpu.pipeline_mode<synchronous>, transform_indices = @transform_2, window_bounds = array<i64: 1, 8>}, {transform_indices = @transform_3, window_bounds = array<i64: 2, 8>}]} {
    %c0_i32 = arith.constant 0 : i32
    %0 = arith.cmpi eq, %arg1, %c0_i32 : i32
    %1 = arith.extui %0 : i1 to i32
    %c0_i32_0 = arith.constant 0 : i32
    %2 = arith.cmpi ne, %1, %c0_i32_0 : i32
    scf.if %2 {
      %cst_12 = arith.constant 0.000000e+00 : f32
      %14 = vector.broadcast %cst_12 : f32 to vector<2x4xf32>
      %c0_13 = arith.constant 0 : index
      %c0_14 = arith.constant 0 : index
      %15 = vector.load %arg6[%c0_13, %c0_14] : memref<2x4xf32, #tpu.memory_space<vmem>>, vector<2x4xf32>
      tpu.vector_store %arg6[%c0_13, %c0_14], %14 {strides = array<i32>} : memref<2x4xf32, #tpu.memory_space<vmem>>, vector<2x4xf32>,
    } else {
    }
    %c0 = arith.constant 0 : index
    %c0_1 = arith.constant 0 : index
    %c0_2 = arith.constant 0 : index
    %3 = vector.load %arg2[%c0, %c0_1, %c0_2] : memref<2x4x256xf32, #tpu.memory_space<vmem>>, vector<2x4x128xf32>
    %cst = arith.constant dense<0.000000e+00> : vector<2x4xf32>
    %4 = vector.multi_reduction <add>, %3, %cst [2] : vector<2x4x128xf32> to vector<2x4xf32>
    %c0_3 = arith.constant 0 : index
    %c0_4 = arith.constant 0 : index
    %c128 = arith.constant 128 : index
    %5 = vector.load %arg2[%c0_3, %c0_4, %c128] : memref<2x4x256xf32, #tpu.memory_space<vmem>>, vector<2x4x128xf32>
    %cst_5 = arith.constant dense<0.000000e+00> : vector<2x4xf32>
    %6 = vector.multi_reduction <add>, %5, %cst_5 [2] : vector<2x4x128xf32> to vector<2x4xf32>
    %7 = arith.addf %4, %6 : vector<2x4xf32>
    %c0_6 = arith.constant 0 : index
    %c0_7 = arith.constant 0 : index
    %8 = vector.load %arg6[%c0_6, %c0_7] : memref<2x4xf32, #tpu.memory_space<vmem>>, vector<2x4xf32>
    %9 = arith.addf %8, %7 : vector<2x4xf32>
    %c0_8 = arith.constant 0 : index
    %c0_9 = arith.constant 0 : index
    %10 = vector.load %arg6[%c0_8, %c0_9] : memref<2x4xf32, #tpu.memory_space<vmem>>, vector<2x4xf32>
    tpu.vector_store %arg6[%c0_8, %c0_9], %9 {strides = array<i32>} : memref<2x4xf32, #tpu.memory_space<vmem>>, vector<2x4xf32>,
    %c0_i32_10 = arith.constant 0 : i32
    %11 = arith.cmpi eq, %arg1, %c0_i32_10 : i32
    %12 = arith.extui %11 : i1 to i32
    %c0_i32_11 = arith.constant 0 : i32
    %13 = arith.cmpi ne, %12, %c0_i32_11 : i32
    scf.if %13 {
      %c0_12 = arith.constant 0 : index
      %c0_13 = arith.constant 0 : index
      %14 = vector.load %arg6[%c0_12, %c0_13] : memref<2x4xf32, #tpu.memory_space<vmem>>, vector<2x4xf32>
      %cst_14 = arith.constant 3.906250e-03 : f32
      %15 = vector.broadcast %cst_14 : f32 to vector<2x4xf32>
      %16 = arith.mulf %14, %15 : vector<2x4xf32>
      %c0_15 = arith.constant 0 : index
      %c0_16 = arith.constant 0 : index
      %17 = vector.load %arg3[%c0_15, %c0_16] : memref<4x8xf32, #tpu.memory_space<vmem>>, vector<4x8xf32>
      %cst_17 = arith.constant dense<0.000000e+00> : vector<2x8xf32>
      %18 = tpu.matmul %16, %17, %cst_17 {dimension_numbers = #tpu.dot_dimension_numbers<[1], [0], [0], [1], [0, 0, 1, 1], [], []>} : vector<2x4xf32>, vector<4x8xf32>, vector<2x8xf32> -> vector<2x8xf32>
      %c0_18 = arith.constant 0 : index
      %c0_19 = arith.constant 0 : index
      %19 = vector.load %arg4[%c0_18, %c0_19] : memref<1x8xf32, #tpu.memory_space<vmem>>, vector<1x8xf32>
      %20 = vector.broadcast %19 : vector<1x8xf32> to vector<2x8xf32>
      %21 = arith.addf %18, %20 : vector<2x8xf32>
      %cst_20 = arith.constant dense<0xFF800000> : vector<2xf32>
      %22 = vector.multi_reduction <maximumf>, %21, %cst_20 [1] : vector<2x8xf32> to vector<2xf32>
      %23 = vector.shape_cast %22 : vector<2xf32> to vector<2x1xf32>
      %24 = vector.broadcast %23 : vector<2x1xf32> to vector<2x8xf32>
      %25 = arith.subf %21, %24 : vector<2x8xf32>
      %26 = math.exp %25 : vector<2x8xf32>
      %cst_21 = arith.constant dense<0.000000e+00> : vector<2xf32>
      %27 = vector.multi_reduction <add>, %26, %cst_21 [1] : vector<2x8xf32> to vector<2xf32>
      %28 = vector.shape_cast %27 : vector<2xf32> to vector<2x1xf32>
      %29 = vector.broadcast %28 : vector<2x1xf32> to vector<2x8xf32>
      %30 = arith.divf %26, %29 : vector<2x8xf32>
      %c0_22 = arith.constant 0 : index
      %c0_23 = arith.constant 0 : index
      %31 = vector.load %arg5[%c0_22, %c0_23] : memref<2x8xf32, #tpu.memory_space<vmem>>, vector<2x8xf32>
      tpu.vector_store %arg5[%c0_22, %c0_23], %30 {strides = array<i32>} : memref<2x8xf32, #tpu.memory_space<vmem>>, vector<2x8xf32>,
    } else {
    }
    return
  }
  func.func @transform_0(%arg0: i32, %arg1: i32) -> (i32, i32, i32) {
    %c0_i32 = arith.constant 0 : i32
    %c0_i32_0 = arith.constant 0 : i32
    return %arg0, %c0_i32, %arg1 : i32, i32, i32
  }
  func.func @transform_1(%arg0: i32, %arg1: i32) -> (i32, i32) {
    %c0_i32 = arith.constant 0 : i32
    %c0_i32_0 = arith.constant 0 : i32
    %c0_i32_1 = arith.constant 0 : i32
    return %c0_i32, %c0_i32_0 : i32, i32
  }
  func.func @transform_2(%arg0: i32, %arg1: i32) -> (i32, i32) {
    %c0_i32 = arith.constant 0 : i32
    %c0_i32_0 = arith.constant 0 : i32
    %c0_i32_1 = arith.constant 0 : i32
    return %c0_i32, %c0_i32_0 : i32, i32
  }
  func.func @transform_3(%arg0: i32, %arg1: i32) -> (i32, i32) {
    %c0_i32 = arith.constant 0 : i32
    %c0_i32_0 = arith.constant 0 : i32
    return %arg0, %c0_i32 : i32, i32
  }
}

</mosaic_0001>

<llo_original>
// kernel: parnet_decoder.1
$region0: #{parnet_decoder.1}
  #allocation0 [shape = 'u32[]', space=smem, size = 0x4, offset = 0x4, fixed_abs, tag = 'smem constant byte address 0x4 - core index']
  #allocation1 [shape = 'u32[144,128]{1,0:T(1,128)}', space=vmem, size = 0x12000, scoped, tag = 'internal scratch']
  #allocation2 [shape = 'f32[2,4]{1,0:T(2,128)}', space=vmem, size = 0x400, scoped, tag = 'scratch operand']
  %s0 = inlined_call_operand.vmem [shape: f32[2,4,256], index: 0, kind: input, shape index: {}]
  %s1 = inlined_call_operand.vmem [shape: f32[4,8], index: 1, kind: input, shape index: {}]
  %s2 = inlined_call_operand.vmem [shape: f32[1,8], index: 2, kind: input, shape index: {}]
  %s3 = inlined_call_operand.hbm [shape: f32[2,8], index: 3, kind: output, shape index: {}]
  %s4 = sld [smem:[#allocation0]]
  $region30: #{parnet_decoder.1} parent=0
    _
  %s6 = ssub.s32 1, %s4
  %s7 = scalar_select 0, %s6, %s4
  $region1: #{parnet_decoder.1} parent=0
    #allocation3 [shape = 'u8[1024]{0}', space=vmem, size = 0x400, scoped, tag = 'output window, operand 0, single buffered']
    #allocation4 [shape = 's32[1]{0}', space=sflag, size = 0x4, scoped, tag = 'scoped memory for parnet_decoder.1']
    %8 = vsyncpa [#allocation4], 0
    // Predicated region
    $region2: #{parnet_decoder.1} parent=1 // pred_check
      _
    $region3: #{parnet_decoder.1} parent=1 // pred_check_branch
      %10 = sbr.rel (0) target = $region5
    $region4: #{parnet_decoder.1} parent=1 // pred_region
      _
    $region5: #{parnet_decoder.1} parent=1 // pred_fallthru
      _
    // Predicated region
    $region6: #{parnet_decoder.1} parent=1 // pred_check
      _
    $region7: #{parnet_decoder.1} parent=1 // pred_check_branch
      %12 = sbr.rel (0) target = $region9
    $region8: #{parnet_decoder.1} parent=1 // pred_region
      _
    $region9: #{parnet_decoder.1} parent=1 // pred_fallthru
      _
    // Predicated region
    $region10: #{parnet_decoder.1} parent=1 // pred_check
      _
    $region11: #{parnet_decoder.1} parent=1 // pred_check_branch
      %14 = sbr.rel (0) target = $region13
    $region12: #{parnet_decoder.1} parent=1 // pred_region
      _
    $region13: #{parnet_decoder.1} parent=1 // pred_fallthru
      _
    %p15 = scmp.eq.s32.totalorder 0, 0
    // Predicated region
    $region14: #{parnet_decoder.1} parent=1 // pred_check
      %p16 = pneg %p15
    $region15: #{parnet_decoder.1} parent=1 // pred_check_branch
      %18 = sbr.rel (%p16) target = $region17
    $region16: #{parnet_decoder.1} parent=1 // pred_region
      %vm19 = vcmask 25600
      %20 = vst.msk [vmem:[#allocation2] sm:$0x3] %vm19, 0.0
    $region17: #{parnet_decoder.1} parent=1 // pred_fallthru
      _
    %v21 = vld [vmem:[%s0] sm:$0xf]
    %v22 = vld [vmem:[%s0 + $0x8] sm:$0xf]
    %vm23 = vcmask 1043456
    %v24 = vsel %vm23, %v21, 0.0
    %25 = vadd.xlane.f32.xlu0 %v24
    %v26 = vpop.xlane.xlu0 %25
    %v27 = vsel %vm23, %v22, 0.0
    %28 = vadd.xlane.f32.xlu0 %v27
    %v29 = vpop.xlane.xlu0 %28
    %v30 = vld [vmem:[%s0 + $0x4] sm:$0xf]
    %v31 = vld [vmem:[%s0 + $0xc] sm:$0xf]
    %v32 = vsel %vm23, %v30, 0.0
    %33 = vadd.xlane.f32.xlu0 %v32
    %v34 = vpop.xlane.xlu0 %33
    %v35 = vsel %vm23, %v31, 0.0
    %36 = vadd.xlane.f32.xlu0 %v35
    %v37 = vpop.xlane.xlu0 %36
    %v38 = vadd.f32 %v26, %v34
    %v39 = vadd.f32 %v29, %v37
    %v40 = vld [vmem:[#allocation2] sm:$0x3]
    %v43 = vlaneseq
    %v44 = vand.u32 %v43, 127
    %v45 = vlaneseq
    %v46 = vshrl.u32 %v45, 7
    %v47 = vsub.s32 %v44, %v46
    %v48 = vrot.slane %v38, %v47
    %v49 = vlaneseq
    %v50 = vshrl.u32 %v49, 7
    %v51 = vsub.s32 %v44, %v50
    %v52 = vrot.slane %v39, %v51
    %vm53 = vcmask 1041409
    %v54 = vsel %vm53, %v52, %v48
    %v56 = vadd.f32 %v40, %v54
    %vm57 = vcmask 25600
    %58 = vst.msk [vmem:[#allocation2] sm:$0x3] %vm57, %v56
    // Predicated region
    $region18: #{parnet_decoder.1} parent=1 // pred_check
      %p59 = pneg %p15
    $region19: #{parnet_decoder.1} parent=1 // pred_check_branch
      %61 = sbr.rel (%p59) target = $region21
    $region20: #{parnet_decoder.1} parent=1 // pred_region
      %v62 = vld [vmem:[#allocation2] sm:$0x3]
      %v63 = vmul.f32 %v62, 0.00390625
      %v64 = vld [vmem:[%s1] sm:$0xf]
      %v65 = vld [vmem:[%s2] sm:$0x1]
      %v67 = vlaneseq
      %v68 = vshrl.u32 %v67, 7
      %v69 = vsub.s32 0, %v68
      %v70 = vrot.slane %v65, %v69
      %vm72 = vcmask 31744
      %v74 = vsel %vm72, %v63, 0
      %v77 = vsel %vm23, %v64, 0
      %79 = vmatprep.subr.mxu0 0.0
      %80 = vmatpush1.msra.mxu0 %v77
      %81 = vmatprep.subr.mxu0 0.0
      %82 = vmatpush1.msra.mxu0 0.0
      %83 = vmatprep.subr.mxu0 0.0
      %84 = vmatpush1.msra.mxu0 0.0
      %85 = vmatprep.subr.mxu0 0.0
      %86 = vmatpush1.msra.mxu0 0.0
      %87 = vmatprep.subr.mxu0 0.0
      %88 = vmatpush1.msra.mxu0 0.0
      %89 = vmatprep.subr.mxu0 0.0
      %90 = vmatpush1.msra.mxu0 0.0
      %91 = vmatprep.subr.mxu0 0.0
      %92 = vmatpush1.msra.mxu0 0.0
      %93 = vmatprep.subr.mxu0 0.0
      %94 = vmatpush1.msra.mxu0 0.0
      %95 = vmatprep.subr.mxu0 0.0
      %96 = vmatpush1.msra.mxu0 0.0
      %97 = vmatprep.subr.mxu0 0.0
      %98 = vmatpush1.msra.mxu0 0.0
      %99 = vmatprep.subr.mxu0 0.0
      %100 = vmatpush1.msra.mxu0 0.0
      %101 = vmatprep.subr.mxu0 0.0
      %102 = vmatpush1.msra.mxu0 0.0
      %103 = vmatprep.subr.mxu0 0.0
      %104 = vmatpush1.msra.mxu0 0.0
      %105 = vmatprep.subr.mxu0 0.0
      %106 = vmatpush1.msra.mxu0 0.0
      %107 = vmatprep.subr.mxu0 0.0
      %108 = vmatpush1.msra.mxu0 0.0
      %109 = vmatprep.subr.mxu0 0.0
      %110 = vmatpush1.msra.mxu0 0.0
      %111 = vmatprep.subr.mxu0 0.0
      %112 = vmatpush1.msra.mxu0 0.0
      %113 = vmatprep.subr.mxu0 0.0
      %114 = vmatpush1.msra.mxu0 0.0
      %115 = vmatprep.subr.mxu0 0.0
      %116 = vmatpush1.msra.mxu0 0.0
      %117 = vmatprep.subr.mxu0 0.0
      %118 = vmatpush1.msra.mxu0 0.0
      %119 = vmatprep.subr.mxu0 0.0
      %120 = vmatpush1.msra.mxu0 0.0
      %121 = vmatprep.subr.mxu0 0.0
      %122 = vmatpush1.msra.mxu0 0.0
      %123 = vmatprep.subr.mxu0 0.0
      %124 = vmatpush1.msra.mxu0 0.0
      %125 = vmatprep.subr.mxu0 0.0
      %126 = vmatpush1.msra.mxu0 0.0
      %127 = vmatprep.subr.mxu0 0.0
      %128 = vmatpush1.msra.mxu0 0.0
      %129 = vmatprep.subr.mxu0 0.0
      %130 = vmatpush1.msra.mxu0 0.0
      %131 = vmatprep.subr.mxu0 0.0
      %132 = vmatpush1.msra.mxu0 0.0
      %133 = vmatprep.subr.mxu0 0.0
      %134 = vmatpush1.msra.mxu0 0.0
      %135 = vmatprep.subr.mxu0 0.0
      %136 = vmatpush1.msra.mxu0 0.0
      %137 = vmatprep.subr.mxu0 0.0
      %138 = vmatpush1.msra.mxu0 0.0
      %139 = vmatprep.subr.mxu0 0.0
      %140 = vmatpush1.msra.mxu0 0.0
      %141 = vmatprep.subr.mxu0 0.0
      %142 = vmatpush1.msra.mxu0 0.0
      %143 = vmatprep.mubr.f32.mxu0 0.0
      %144 = vmatmul.mubr.f32.gmra.mrb[0].mxu0 %v74
      %v145 = vpop.f32.mrb[0].mxu0
      %v146 = vadd.f32 %v70, %v145
      %v147 = vpop.f32.mrb[0].mxu0
      %148 = vdwg.mxu0
      %vm149 = vcmask 58368
      %v150 = vsel %vm149, %v146, -inf
      %151 = vmax.xlane.f32.xlu0 %v150
      %v152 = vpop.xlane.xlu0 %151
      %v153 = vsub.f32 %v146, %v152
      %v154 = vmul.f32 %v153, 1.442695
      %v155 = vpow.pop %v154
      %v156 = vsel %vm149, %v155, 0.0
      %157 = vadd.xlane.f32.xlu0 %v156
      %v158 = vpop.xlane.xlu0 %157
      %v159 = vrcp.pop %v158
      %v160 = vmul.f32 %v155, %v159
      %161 = vst.msk [vmem:[#allocation3] sm:$0x3] %vm149, %v160
    $region21: #{parnet_decoder.1} parent=1 // pred_fallthru
      _
    // Predicated region
    $region22: #{parnet_decoder.1} parent=1 // pred_check
      _
    $region23: #{parnet_decoder.1} parent=1 // pred_check_branch
      %163 = sbr.rel (0) target = $region25
    $region24: #{parnet_decoder.1} parent=1 // pred_region
      %s165 = ssub.s32 32, 32
      %166 = vsyncadd [#allocation4], %s165
      %s168 = sshll.u32 [#allocation3], 4
      %s169 = int_to_ptr.vmem [resolvable:$true] %s168
      %171 = dma.vmem_to_hbm [thread:$0]  %s169, 32, %s3, [#allocation4]
    $region25: #{parnet_decoder.1} parent=1 // pred_fallthru
      _
    // Predicated region
    $region26: #{parnet_decoder.1} parent=1 // pred_check
      _
    $region27: #{parnet_decoder.1} parent=1 // pred_check_branch
      %173 = sbr.rel (0) target = $region29
    $region28: #{parnet_decoder.1} parent=1 // pred_region
      %174 = dma.done [#allocation4], 32
    $region29: #{parnet_decoder.1} parent=1 // pred_fallthru
      _
    %175 = vsyncpa [#allocation4], 1

</llo_original>
